<compile_context>
chip_gen: v7x
topology: tpu7x:2x2x1
jax: 0.10.0
libtpu: 0.0.40
codegen_flags: <defaults>
</compile_context>

<pallas_src>
import jax
import jax.numpy as jnp
from jax.experimental import pallas as pl
from jax.experimental.pallas import tpu as pltpu


def _rnn_kernel(x_ref, whx_ref, whh_ref, wph_ref, bh_ref, bp_ref, out_ref):
    T, B, D = x_ref.shape
    H = whh_ref.shape[0]

    # Hoist weight / bias loads out of the recurrence (loaded once).
    w_hx = whx_ref[...]              # (D, H)
    w_hh = whh_ref[...]              # (H, H)
    w_ph = wph_ref[...]              # (H, C)
    b_h = bh_ref[...]                # (1, H)
    b_p = bp_ref[...]                # (1, C)

    # One throughput-mode matmul for all T time steps, off the serial chain.
    # (T, B, D) -> (T*B, D): leading-dim merge only, lane layout unchanged.
    x_flat = x_ref[...].reshape(T * B, D)
    xproj = (
        jnp.dot(x_flat, w_hx, preferred_element_type=jnp.float32) + b_h
    ).reshape(T, B, H)               # (T, B, H); b_h folded in once

    h = jnp.zeros((B, H), dtype=jnp.float32)

    # T is a small static trip count: fully unrolled, each step is a single
    # K=H MXU push + tanh on the serial h-dependency chain.
    for t in range(T):
        h = jnp.tanh(
            jnp.dot(h, w_hh, preferred_element_type=jnp.float32) + xproj[t]
        )

    out_ref[...] = (
        jnp.dot(h, w_ph, preferred_element_type=jnp.float32) + b_p
    ).astype(out_ref.dtype)


def vanilla_rnn_forward(x, W_hx, W_hh, W_ph, b_h, b_p):
    """x: (B, T, D) float32.  Returns (B, num_classes) float32."""
    B, T, D = x.shape
    C = W_ph.shape[1]

    # Time-major layout so the kernel slices the leading dim per step.
    x_tbd = jnp.transpose(x, (1, 0, 2))          # (T, B, D)

    vmem_spec = pl.BlockSpec(memory_space=pltpu.MemorySpace.VMEM)

    return pl.pallas_call(
        _rnn_kernel,
        out_shape=jax.ShapeDtypeStruct((B, C), jnp.float32),
        in_specs=[vmem_spec] * 6,    # x, W_hx, W_hh, W_ph, b_h, b_p in VMEM
        out_specs=vmem_spec,
    )(x_tbd, W_hx, W_hh, W_ph, b_h, b_p)


def _xavier_normal(key, shape):
    fan_in, fan_out = shape
    std = (2.0 / (fan_in + fan_out)) ** 0.5
    return std * jax.random.normal(key, shape, dtype=jnp.float32)


def _reference_forward(x, W_hx, W_hh, W_ph, b_h, b_p):
    B, T, D = x.shape
    h = jnp.zeros((1, W_hx.shape[1]), dtype=jnp.float32)
    for t in range(T):
        h = jnp.tanh(x[:, t] @ W_hx + h @ W_hh + b_h)
    return h @ W_ph + b_p


if __name__ == "__main__":
    # Small shapes consistent with the module's forward.
    batch = 8
    seq_length = 8
    input_dim = 16
    num_hidden = 32
    num_classes = 8

    key = jax.random.PRNGKey(0)
    k_x, k_whx, k_whh, k_wph = jax.random.split(key, 4)

    x = jax.random.normal(k_x, (batch, seq_length, input_dim), dtype=jnp.float32)

    # Deterministic parameter init mirroring nn.init.xavier_normal_ / zeros.
    W_hx = _xavier_normal(k_whx, (input_dim, num_hidden))
    W_hh = _xavier_normal(k_whh, (num_hidden, num_hidden))
    W_ph = _xavier_normal(k_wph, (num_hidden, num_classes))
    b_h = jnp.zeros((1, num_hidden), dtype=jnp.float32)
    b_p = jnp.zeros((1, num_classes), dtype=jnp.float32)

    out = vanilla_rnn_forward(x, W_hx, W_hh, W_ph, b_h, b_p)
    out = jax.block_until_ready(out)

    ref = _reference_forward(x, W_hx, W_hh, W_ph, b_h, b_p)
    assert out.shape == (batch, num_classes)
    assert jnp.allclose(out, ref, atol=1e-5, rtol=1e-5), "mismatch vs reference"

    print("KERNEL_OK")
</pallas_src>

<mosaic_0001>
module attributes {stable_mosaic.version = 11 : i64} {
  func.func @_rnn_kernel(%arg0: memref<8x8x16xf32, #tpu.memory_space<vmem>>, %arg1: memref<16x32xf32, #tpu.memory_space<vmem>>, %arg2: memref<32x32xf32, #tpu.memory_space<vmem>>, %arg3: memref<32x8xf32, #tpu.memory_space<vmem>>, %arg4: memref<1x32xf32, #tpu.memory_space<vmem>>, %arg5: memref<1x8xf32, #tpu.memory_space<vmem>>, %arg6: memref<8x8xf32, #tpu.memory_space<vmem>>) attributes {dimension_semantics = [], scalar_prefetch = 0 : i64, scratch_operands = 0 : i64, tpu.core_type = #tpu.core_type<tc>} {
    %c0 = arith.constant 0 : index
    %c0_0 = arith.constant 0 : index
    %0 = vector.load %arg1[%c0, %c0_0] : memref<16x32xf32, #tpu.memory_space<vmem>>, vector<16x32xf32>
    %c0_1 = arith.constant 0 : index
    %c0_2 = arith.constant 0 : index
    %1 = vector.load %arg2[%c0_1, %c0_2] : memref<32x32xf32, #tpu.memory_space<vmem>>, vector<32x32xf32>
    %c0_3 = arith.constant 0 : index
    %c0_4 = arith.constant 0 : index
    %2 = vector.load %arg3[%c0_3, %c0_4] : memref<32x8xf32, #tpu.memory_space<vmem>>, vector<32x8xf32>
    %c0_5 = arith.constant 0 : index
    %c0_6 = arith.constant 0 : index
    %3 = vector.load %arg4[%c0_5, %c0_6] : memref<1x32xf32, #tpu.memory_space<vmem>>, vector<1x32xf32>
    %c0_7 = arith.constant 0 : index
    %c0_8 = arith.constant 0 : index
    %4 = vector.load %arg5[%c0_7, %c0_8] : memref<1x8xf32, #tpu.memory_space<vmem>>, vector<1x8xf32>
    %c0_9 = arith.constant 0 : index
    %c0_10 = arith.constant 0 : index
    %c0_11 = arith.constant 0 : index
    %5 = vector.load %arg0[%c0_9, %c0_10, %c0_11] : memref<8x8x16xf32, #tpu.memory_space<vmem>>, vector<8x8x16xf32>
    %6 = vector.shape_cast %5 : vector<8x8x16xf32> to vector<64x16xf32>
    %cst = arith.constant dense<0.000000e+00> : vector<64x32xf32>
    %7 = tpu.matmul %6, %0, %cst {dimension_numbers = #tpu.dot_dimension_numbers<[1], [0], [0], [1], [0, 0, 1, 1], [], []>} : vector<64x16xf32>, vector<16x32xf32>, vector<64x32xf32> -> vector<64x32xf32>
    %8 = vector.broadcast %3 : vector<1x32xf32> to vector<64x32xf32>
    %9 = arith.addf %7, %8 : vector<64x32xf32>
    %10 = vector.shape_cast %9 : vector<64x32xf32> to vector<8x8x32xf32>
    %cst_12 = arith.constant 0.000000e+00 : f32
    %11 = vector.broadcast %cst_12 : f32 to vector<8x32xf32>
    %cst_13 = arith.constant dense<0.000000e+00> : vector<8x32xf32>
    %12 = tpu.matmul %11, %1, %cst_13 {dimension_numbers = #tpu.dot_dimension_numbers<[1], [0], [0], [1], [0, 0, 1, 1], [], []>} : vector<8x32xf32>, vector<32x32xf32>, vector<8x32xf32> -> vector<8x32xf32>
    %13 = vector.extract_strided_slice %10 {offsets = [0, 0, 0], sizes = [1, 8, 32], strides = [1, 1, 1]} : vector<8x8x32xf32> to vector<1x8x32xf32>
    %14 = vector.shape_cast %13 : vector<1x8x32xf32> to vector<8x32xf32>
    %15 = arith.addf %12, %14 : vector<8x32xf32>
    %16 = math.tanh %15 : vector<8x32xf32>
    %cst_14 = arith.constant dense<0.000000e+00> : vector<8x32xf32>
    %17 = tpu.matmul %16, %1, %cst_14 {dimension_numbers = #tpu.dot_dimension_numbers<[1], [0], [0], [1], [0, 0, 1, 1], [], []>} : vector<8x32xf32>, vector<32x32xf32>, vector<8x32xf32> -> vector<8x32xf32>
    %18 = vector.extract_strided_slice %10 {offsets = [1, 0, 0], sizes = [1, 8, 32], strides = [1, 1, 1]} : vector<8x8x32xf32> to vector<1x8x32xf32>
    %19 = vector.shape_cast %18 : vector<1x8x32xf32> to vector<8x32xf32>
    %20 = arith.addf %17, %19 : vector<8x32xf32>
    %21 = math.tanh %20 : vector<8x32xf32>
    %cst_15 = arith.constant dense<0.000000e+00> : vector<8x32xf32>
    %22 = tpu.matmul %21, %1, %cst_15 {dimension_numbers = #tpu.dot_dimension_numbers<[1], [0], [0], [1], [0, 0, 1, 1], [], []>} : vector<8x32xf32>, vector<32x32xf32>, vector<8x32xf32> -> vector<8x32xf32>
    %23 = vector.extract_strided_slice %10 {offsets = [2, 0, 0], sizes = [1, 8, 32], strides = [1, 1, 1]} : vector<8x8x32xf32> to vector<1x8x32xf32>
    %24 = vector.shape_cast %23 : vector<1x8x32xf32> to vector<8x32xf32>
    %25 = arith.addf %22, %24 : vector<8x32xf32>
    %26 = math.tanh %25 : vector<8x32xf32>
    %cst_16 = arith.constant dense<0.000000e+00> : vector<8x32xf32>
    %27 = tpu.matmul %26, %1, %cst_16 {dimension_numbers = #tpu.dot_dimension_numbers<[1], [0], [0], [1], [0, 0, 1, 1], [], []>} : vector<8x32xf32>, vector<32x32xf32>, vector<8x32xf32> -> vector<8x32xf32>
    %28 = vector.extract_strided_slice %10 {offsets = [3, 0, 0], sizes = [1, 8, 32], strides = [1, 1, 1]} : vector<8x8x32xf32> to vector<1x8x32xf32>
    %29 = vector.shape_cast %28 : vector<1x8x32xf32> to vector<8x32xf32>
    %30 = arith.addf %27, %29 : vector<8x32xf32>
    %31 = math.tanh %30 : vector<8x32xf32>
    %cst_17 = arith.constant dense<0.000000e+00> : vector<8x32xf32>
    %32 = tpu.matmul %31, %1, %cst_17 {dimension_numbers = #tpu.dot_dimension_numbers<[1], [0], [0], [1], [0, 0, 1, 1], [], []>} : vector<8x32xf32>, vector<32x32xf32>, vector<8x32xf32> -> vector<8x32xf32>
    %33 = vector.extract_strided_slice %10 {offsets = [4, 0, 0], sizes = [1, 8, 32], strides = [1, 1, 1]} : vector<8x8x32xf32> to vector<1x8x32xf32>
    %34 = vector.shape_cast %33 : vector<1x8x32xf32> to vector<8x32xf32>
    %35 = arith.addf %32, %34 : vector<8x32xf32>
    %36 = math.tanh %35 : vector<8x32xf32>
    %cst_18 = arith.constant dense<0.000000e+00> : vector<8x32xf32>
    %37 = tpu.matmul %36, %1, %cst_18 {dimension_numbers = #tpu.dot_dimension_numbers<[1], [0], [0], [1], [0, 0, 1, 1], [], []>} : vector<8x32xf32>, vector<32x32xf32>, vector<8x32xf32> -> vector<8x32xf32>
    %38 = vector.extract_strided_slice %10 {offsets = [5, 0, 0], sizes = [1, 8, 32], strides = [1, 1, 1]} : vector<8x8x32xf32> to vector<1x8x32xf32>
    %39 = vector.shape_cast %38 : vector<1x8x32xf32> to vector<8x32xf32>
    %40 = arith.addf %37, %39 : vector<8x32xf32>
    %41 = math.tanh %40 : vector<8x32xf32>
    %cst_19 = arith.constant dense<0.000000e+00> : vector<8x32xf32>
    %42 = tpu.matmul %41, %1, %cst_19 {dimension_numbers = #tpu.dot_dimension_numbers<[1], [0], [0], [1], [0, 0, 1, 1], [], []>} : vector<8x32xf32>, vector<32x32xf32>, vector<8x32xf32> -> vector<8x32xf32>
    %43 = vector.extract_strided_slice %10 {offsets = [6, 0, 0], sizes = [1, 8, 32], strides = [1, 1, 1]} : vector<8x8x32xf32> to vector<1x8x32xf32>
    %44 = vector.shape_cast %43 : vector<1x8x32xf32> to vector<8x32xf32>
    %45 = arith.addf %42, %44 : vector<8x32xf32>
    %46 = math.tanh %45 : vector<8x32xf32>
    %cst_20 = arith.constant dense<0.000000e+00> : vector<8x32xf32>
    %47 = tpu.matmul %46, %1, %cst_20 {dimension_numbers = #tpu.dot_dimension_numbers<[1], [0], [0], [1], [0, 0, 1, 1], [], []>} : vector<8x32xf32>, vector<32x32xf32>, vector<8x32xf32> -> vector<8x32xf32>
    %48 = vector.extract_strided_slice %10 {offsets = [7, 0, 0], sizes = [1, 8, 32], strides = [1, 1, 1]} : vector<8x8x32xf32> to vector<1x8x32xf32>
    %49 = vector.shape_cast %48 : vector<1x8x32xf32> to vector<8x32xf32>
    %50 = arith.addf %47, %49 : vector<8x32xf32>
    %51 = math.tanh %50 : vector<8x32xf32>
    %cst_21 = arith.constant dense<0.000000e+00> : vector<8x8xf32>
    %52 = tpu.matmul %51, %2, %cst_21 {dimension_numbers = #tpu.dot_dimension_numbers<[1], [0], [0], [1], [0, 0, 1, 1], [], []>} : vector<8x32xf32>, vector<32x8xf32>, vector<8x8xf32> -> vector<8x8xf32>
    %53 = vector.broadcast %4 : vector<1x8xf32> to vector<8x8xf32>
    %54 = arith.addf %52, %53 : vector<8x8xf32>
    %c0_22 = arith.constant 0 : index
    %c0_23 = arith.constant 0 : index
    %55 = vector.load %arg6[%c0_22, %c0_23] : memref<8x8xf32, #tpu.memory_space<vmem>>, vector<8x8xf32>
    tpu.vector_store %arg6[%c0_22, %c0_23], %54 {strides = array<i32>} : memref<8x8xf32, #tpu.memory_space<vmem>>, vector<8x8xf32>,
    return
  }
}

</mosaic_0001>

<llo_original>
// kernel: tpu_custom_call.1
$region0: #{tpu_custom_call.1}
  #allocation0 [shape = 'u32[]', space=smem, size = 0x4, offset = 0x4, fixed_abs, tag = 'smem constant byte address 0x4 - core index']
  #allocation1 [shape = 'u32[144,128]{1,0:T(1,128)}', space=vmem, size = 0x12000, scoped, tag = 'internal scratch']
  %s0 = inlined_call_operand.hbm [shape: f32[8,8,16], index: 0, kind: input, shape index: {}]
  %s1 = inlined_call_operand.hbm [shape: f32[16,32], index: 1, kind: input, shape index: {}]
  %s2 = inlined_call_operand.vmem [shape: f32[32,32], index: 2, kind: input, shape index: {}]
  %s3 = inlined_call_operand.vmem [shape: f32[32,8], index: 3, kind: input, shape index: {}]
  %s4 = inlined_call_operand.vmem [shape: f32[1,32], index: 4, kind: input, shape index: {}]
  %s5 = inlined_call_operand.vmem [shape: f32[1,8], index: 5, kind: input, shape index: {}]
  %s6 = inlined_call_operand.hbm [shape: f32[8,8], index: 6, kind: output, shape index: {}]
  %s7 = sld [smem:[#allocation0]]
  $region42: #{tpu_custom_call.1} parent=0
    _
  %s9 = ssub.s32 1, %s7
  %s10 = scalar_select 0, %s9, %s7
  $region1: #{tpu_custom_call.1} parent=0
    #allocation2 [shape = 'u8[32768]{0}', space=vmem, size = 0x8000, scoped, tag = 'input window, operand 0, single buffered']
    #allocation3 [shape = 's32[1]{0}', space=sflag, size = 0x4, scoped, tag = 'scoped memory for tpu_custom_call.1']
    #allocation4 [shape = 's32[1]{0}', space=sflag, size = 0x4, scoped, tag = 'scoped memory for tpu_custom_call.1']
    #allocation5 [shape = 'u8[8192]{0}', space=vmem, size = 0x2000, scoped, tag = 'input window, operand 1, single buffered']
    #allocation6 [shape = 's32[1]{0}', space=sflag, size = 0x4, scoped, tag = 'scoped memory for tpu_custom_call.1']
    #allocation7 [shape = 'u8[4096]{0}', space=vmem, size = 0x1000, scoped, tag = 'output window, operand 0, single buffered']
    %11 = vsyncpa [#allocation3], 0
    %12 = vsyncpa [#allocation6], 0
    %13 = vsyncpa [#allocation4], 0
    // Predicated region
    $region2: #{tpu_custom_call.1} parent=1 // pred_check
      _
    $region3: #{tpu_custom_call.1} parent=1 // pred_check_branch
      %15 = sbr.rel (0) target = $region5
    $region4: #{tpu_custom_call.1} parent=1 // pred_region
      %s17 = ssub.s32 1024, 1024
      %18 = vsyncadd [#allocation3], %s17
      %s19 = sshll.u32 [#allocation2], 4
      %s20 = int_to_ptr.vmem [resolvable:$true] %s19
      %25 = dma.hbm_to_vmem [thread:$0]  %s0, 1024, %s20, [#allocation3], 128, 128, 8
    $region5: #{tpu_custom_call.1} parent=1 // pred_fallthru
      _
    // Predicated region
    $region6: #{tpu_custom_call.1} parent=1 // pred_check
      _
    $region7: #{tpu_custom_call.1} parent=1 // pred_check_branch
      %27 = sbr.rel (0) target = $region9
    $region8: #{tpu_custom_call.1} parent=1 // pred_region
      %s29 = ssub.s32 256, 256
      %30 = vsyncadd [#allocation6], %s29
      %s31 = sshll.u32 [#allocation5], 4
      %s32 = int_to_ptr.vmem [resolvable:$true] %s31
      %37 = dma.hbm_to_vmem [thread:$0]  %s1, 256, %s32, [#allocation6], 128, 128, 8
    $region9: #{tpu_custom_call.1} parent=1 // pred_fallthru
      _
    // Predicated region
    $region10: #{tpu_custom_call.1} parent=1 // pred_check
      _
    $region11: #{tpu_custom_call.1} parent=1 // pred_check_branch
      %39 = sbr.rel (0) target = $region13
    $region12: #{tpu_custom_call.1} parent=1 // pred_region
      _
    $region13: #{tpu_custom_call.1} parent=1 // pred_fallthru
      _
    // Predicated region
    $region14: #{tpu_custom_call.1} parent=1 // pred_check
      _
    $region15: #{tpu_custom_call.1} parent=1 // pred_check_branch
      %41 = sbr.rel (0) target = $region17
    $region16: #{tpu_custom_call.1} parent=1 // pred_region
      _
    $region17: #{tpu_custom_call.1} parent=1 // pred_fallthru
      _
    // Predicated region
    $region18: #{tpu_custom_call.1} parent=1 // pred_check
      _
    $region19: #{tpu_custom_call.1} parent=1 // pred_check_branch
      %43 = sbr.rel (0) target = $region21
    $region20: #{tpu_custom_call.1} parent=1 // pred_region
      _
    $region21: #{tpu_custom_call.1} parent=1 // pred_fallthru
      _
    // Predicated region
    $region22: #{tpu_custom_call.1} parent=1 // pred_check
      _
    $region23: #{tpu_custom_call.1} parent=1 // pred_check_branch
      %45 = sbr.rel (0) target = $region25
    $region24: #{tpu_custom_call.1} parent=1 // pred_region
      _
    $region25: #{tpu_custom_call.1} parent=1 // pred_fallthru
      _
    // Predicated region
    $region26: #{tpu_custom_call.1} parent=1 // pred_check
      _
    $region27: #{tpu_custom_call.1} parent=1 // pred_check_branch
      %47 = sbr.rel (0) target = $region29
    $region28: #{tpu_custom_call.1} parent=1 // pred_region
      %48 = dma.done [#allocation3], 1024
    $region29: #{tpu_custom_call.1} parent=1 // pred_fallthru
      _
    // Predicated region
    $region30: #{tpu_custom_call.1} parent=1 // pred_check
      _
    $region31: #{tpu_custom_call.1} parent=1 // pred_check_branch
      %50 = sbr.rel (0) target = $region33
    $region32: #{tpu_custom_call.1} parent=1 // pred_region
      %51 = dma.done [#allocation6], 256
    $region33: #{tpu_custom_call.1} parent=1 // pred_fallthru
      _
    %v52 = vld [vmem:[#allocation5] sm:$0xff]
    %v53 = vld [vmem:[#allocation5 + $0x8] sm:$0xff]
    %v54 = vld [vmem:[%s2] sm:$0xff]
    %v55 = vld [vmem:[%s2 + $0x8] sm:$0xff]
    %v56 = vld [vmem:[%s2 + $0x10] sm:$0xff]
    %v57 = vld [vmem:[%s2 + $0x18] sm:$0xff]
    %v58 = vld [vmem:[%s3] sm:$0xff]
    %v59 = vld [vmem:[%s3 + $0x8] sm:$0xff]
    %v60 = vld [vmem:[%s3 + $0x10] sm:$0xff]
    %v61 = vld [vmem:[%s3 + $0x18] sm:$0xff]
    %v62 = vld [vmem:[%s4] sm:$0x1]
    %v63 = vld [vmem:[%s5] sm:$0x1]
    %v64 = vld [vmem:[#allocation2] sm:$0xff]
    %v65 = vld [vmem:[#allocation2 + $0x8] sm:$0xff]
    %v66 = vld [vmem:[#allocation2 + $0x10] sm:$0xff]
    %v67 = vld [vmem:[#allocation2 + $0x18] sm:$0xff]
    %v68 = vld [vmem:[#allocation2 + $0x20] sm:$0xff]
    %v69 = vld [vmem:[#allocation2 + $0x28] sm:$0xff]
    %v70 = vld [vmem:[#allocation2 + $0x30] sm:$0xff]
    %v71 = vld [vmem:[#allocation2 + $0x38] sm:$0xff]
    %v73 = vlaneseq
    %v74 = vshrl.u32 %v73, 7
    %v75 = vsub.s32 0, %v74
    %v76 = vrot.slane %v62, %v75
    %vm78 = vcmask 130048
    %v80 = vsel %vm78, %v64, 0
    %v83 = vsel %vm78, %v65, 0
    %v86 = vsel %vm78, %v66, 0
    %v89 = vsel %vm78, %v67, 0
    %v92 = vsel %vm78, %v68, 0
    %v95 = vsel %vm78, %v69, 0
    %v98 = vsel %vm78, %v70, 0
    %v101 = vsel %vm78, %v71, 0
    %103 = vmatprep.subr.mxu0 0.0
    %104 = vmatpush1.msra.mxu0 %v52
    %105 = vmatprep.subr.mxu0 0.0
    %106 = vmatpush1.msra.mxu0 %v53
    %107 = vmatprep.subr.mxu0 0.0
    %108 = vmatpush1.msra.mxu0 0.0
    %109 = vmatprep.subr.mxu0 0.0
    %110 = vmatpush1.msra.mxu0 0.0
    %111 = vmatprep.subr.mxu0 0.0
    %112 = vmatpush1.msra.mxu0 0.0
    %113 = vmatprep.subr.mxu0 0.0
    %114 = vmatpush1.msra.mxu0 0.0
    %115 = vmatprep.subr.mxu0 0.0
    %116 = vmatpush1.msra.mxu0 0.0
    %117 = vmatprep.subr.mxu0 0.0
    %118 = vmatpush1.msra.mxu0 0.0
    %119 = vmatprep.subr.mxu0 0.0
    %120 = vmatpush1.msra.mxu0 0.0
    %121 = vmatprep.subr.mxu0 0.0
    %122 = vmatpush1.msra.mxu0 0.0
    %123 = vmatprep.subr.mxu0 0.0
    %124 = vmatpush1.msra.mxu0 0.0
    %125 = vmatprep.subr.mxu0 0.0
    %126 = vmatpush1.msra.mxu0 0.0
    %127 = vmatprep.subr.mxu0 0.0
    %128 = vmatpush1.msra.mxu0 0.0
    %129 = vmatprep.subr.mxu0 0.0
    %130 = vmatpush1.msra.mxu0 0.0
    %131 = vmatprep.subr.mxu0 0.0
    %132 = vmatpush1.msra.mxu0 0.0
    %133 = vmatprep.subr.mxu0 0.0
    %134 = vmatpush1.msra.mxu0 0.0
    %135 = vmatprep.subr.mxu0 0.0
    %136 = vmatpush1.msra.mxu0 0.0
    %137 = vmatprep.subr.mxu0 0.0
    %138 = vmatpush1.msra.mxu0 0.0
    %139 = vmatprep.subr.mxu0 0.0
    %140 = vmatpush1.msra.mxu0 0.0
    %141 = vmatprep.subr.mxu0 0.0
    %142 = vmatpush1.msra.mxu0 0.0
    %143 = vmatprep.subr.mxu0 0.0
    %144 = vmatpush1.msra.mxu0 0.0
    %145 = vmatprep.subr.mxu0 0.0
    %146 = vmatpush1.msra.mxu0 0.0
    %147 = vmatprep.subr.mxu0 0.0
    %148 = vmatpush1.msra.mxu0 0.0
    %149 = vmatprep.subr.mxu0 0.0
    %150 = vmatpush1.msra.mxu0 0.0
    %151 = vmatprep.subr.mxu0 0.0
    %152 = vmatpush1.msra.mxu0 0.0
    %153 = vmatprep.subr.mxu0 0.0
    %154 = vmatpush1.msra.mxu0 0.0
    %155 = vmatprep.subr.mxu0 0.0
    %156 = vmatpush1.msra.mxu0 0.0
    %157 = vmatprep.subr.mxu0 0.0
    %158 = vmatpush1.msra.mxu0 0.0
    %159 = vmatprep.subr.mxu0 0.0
    %160 = vmatpush1.msra.mxu0 0.0
    %161 = vmatprep.subr.mxu0 0.0
    %162 = vmatpush1.msra.mxu0 0.0
    %163 = vmatprep.subr.mxu0 0.0
    %164 = vmatpush1.msra.mxu0 0.0
    %165 = vmatprep.subr.mxu0 0.0
    %166 = vmatpush1.msra.mxu0 0.0
    %167 = vmatprep.mubr.f32.mxu0 0.0
    %168 = vmatmul.mubr.f32.gmra.mrb[0].mxu0 %v80
    %v169 = vpop.f32.mrb[0].mxu0
    %v170 = vadd.f32 %v76, %v169
    %v171 = vpop.f32.mrb[0].mxu0
    %172 = vmatprep.mubr.f32.mxu0 0.0
    %173 = vmatmul.mubr.f32.gmra.mrb[0].mxu0 %v83
    %v174 = vpop.f32.mrb[0].mxu0
    %v175 = vadd.f32 %v76, %v174
    %v176 = vpop.f32.mrb[0].mxu0
    %177 = vmatprep.mubr.f32.mxu0 0.0
    %178 = vmatmul.mubr.f32.gmra.mrb[0].mxu0 %v86
    %v179 = vpop.f32.mrb[0].mxu0
    %v180 = vadd.f32 %v76, %v179
    %v181 = vpop.f32.mrb[0].mxu0
    %182 = vmatprep.mubr.f32.mxu0 0.0
    %183 = vmatmul.mubr.f32.gmra.mrb[0].mxu0 %v89
    %v184 = vpop.f32.mrb[0].mxu0
    %v185 = vadd.f32 %v76, %v184
    %v186 = vpop.f32.mrb[0].mxu0
    %187 = vmatprep.mubr.f32.mxu0 0.0
    %188 = vmatmul.mubr.f32.gmra.mrb[0].mxu0 %v92
    %v189 = vpop.f32.mrb[0].mxu0
    %v190 = vadd.f32 %v76, %v189
    %v191 = vpop.f32.mrb[0].mxu0
    %192 = vmatprep.mubr.f32.mxu0 0.0
    %193 = vmatmul.mubr.f32.gmra.mrb[0].mxu0 %v95
    %v194 = vpop.f32.mrb[0].mxu0
    %v195 = vadd.f32 %v76, %v194
    %v196 = vpop.f32.mrb[0].mxu0
    %197 = vmatprep.mubr.f32.mxu0 0.0
    %198 = vmatmul.mubr.f32.gmra.mrb[0].mxu0 %v98
    %v199 = vpop.f32.mrb[0].mxu0
    %v200 = vadd.f32 %v76, %v199
    %v201 = vpop.f32.mrb[0].mxu0
    %202 = vmatprep.mubr.f32.mxu0 0.0
    %203 = vmatmul.mubr.f32.gmra.mrb[0].mxu0 %v101
    %v204 = vpop.f32.mrb[0].mxu0
    %v205 = vadd.f32 %v76, %v204
    %v206 = vpop.f32.mrb[0].mxu0
    %207 = vdwg.mxu0
    %vm208 = vcmask 261120
    %v210 = vsel %vm208, 0.0, 0
    %212 = vmatprep.subr.mxu0 0.0
    %213 = vmatpush1.msra.mxu0 %v54
    %214 = vmatprep.subr.mxu0 0.0
    %215 = vmatpush1.msra.mxu0 %v55
    %216 = vmatprep.subr.mxu0 0.0
    %217 = vmatpush1.msra.mxu0 %v56
    %218 = vmatprep.subr.mxu0 0.0
    %219 = vmatpush1.msra.mxu0 %v57
    %220 = vmatprep.subr.mxu0 0.0
    %221 = vmatpush1.msra.mxu0 0.0
    %222 = vmatprep.subr.mxu0 0.0
    %223 = vmatpush1.msra.mxu0 0.0
    %224 = vmatprep.subr.mxu0 0.0
    %225 = vmatpush1.msra.mxu0 0.0
    %226 = vmatprep.subr.mxu0 0.0
    %227 = vmatpush1.msra.mxu0 0.0
    %228 = vmatprep.subr.mxu0 0.0
    %229 = vmatpush1.msra.mxu0 0.0
    %230 = vmatprep.subr.mxu0 0.0
    %231 = vmatpush1.msra.mxu0 0.0
    %232 = vmatprep.subr.mxu0 0.0
    %233 = vmatpush1.msra.mxu0 0.0
    %234 = vmatprep.subr.mxu0 0.0
    %235 = vmatpush1.msra.mxu0 0.0
    %236 = vmatprep.subr.mxu0 0.0
    %237 = vmatpush1.msra.mxu0 0.0
    %238 = vmatprep.subr.mxu0 0.0
    %239 = vmatpush1.msra.mxu0 0.0
    %240 = vmatprep.subr.mxu0 0.0
    %241 = vmatpush1.msra.mxu0 0.0
    %242 = vmatprep.subr.mxu0 0.0
    %243 = vmatpush1.msra.mxu0 0.0
    %244 = vmatprep.subr.mxu0 0.0
    %245 = vmatpush1.msra.mxu0 0.0
    %246 = vmatprep.subr.mxu0 0.0
    %247 = vmatpush1.msra.mxu0 0.0
    %248 = vmatprep.subr.mxu0 0.0
    %249 = vmatpush1.msra.mxu0 0.0
    %250 = vmatprep.subr.mxu0 0.0
    %251 = vmatpush1.msra.mxu0 0.0
    %252 = vmatprep.subr.mxu0 0.0
    %253 = vmatpush1.msra.mxu0 0.0
    %254 = vmatprep.subr.mxu0 0.0
    %255 = vmatpush1.msra.mxu0 0.0
    %256 = vmatprep.subr.mxu0 0.0
    %257 = vmatpush1.msra.mxu0 0.0
    %258 = vmatprep.subr.mxu0 0.0
    %259 = vmatpush1.msra.mxu0 0.0
    %260 = vmatprep.subr.mxu0 0.0
    %261 = vmatpush1.msra.mxu0 0.0
    %262 = vmatprep.subr.mxu0 0.0
    %263 = vmatpush1.msra.mxu0 0.0
    %264 = vmatprep.subr.mxu0 0.0
    %265 = vmatpush1.msra.mxu0 0.0
    %266 = vmatprep.subr.mxu0 0.0
    %267 = vmatpush1.msra.mxu0 0.0
    %268 = vmatprep.subr.mxu0 0.0
    %269 = vmatpush1.msra.mxu0 0.0
    %270 = vmatprep.subr.mxu0 0.0
    %271 = vmatpush1.msra.mxu0 0.0
    %272 = vmatprep.subr.mxu0 0.0
    %273 = vmatpush1.msra.mxu0 0.0
    %274 = vmatprep.subr.mxu0 0.0
    %275 = vmatpush1.msra.mxu0 0.0
    %276 = vmatprep.mubr.f32.mxu0 0.0
    %277 = vmatmul.mubr.f32.gmra.mrb[0].mxu0 %v210
    %v278 = vpop.f32.mrb[0].mxu0
    %v279 = vadd.f32 %v170, %v278
    %v280 = vpop.f32.mrb[0].mxu0
    %281 = vdwg.mxu0
    %v282 = vtanh.pop %v279
    %v284 = vsel %vm208, %v282, 0
    %286 = vmatprep.subr.mxu0 0.0
    %287 = vmatpush1.msra.mxu0 %v54
    %288 = vmatprep.subr.mxu0 0.0
    %289 = vmatpush1.msra.mxu0 %v55
    %290 = vmatprep.subr.mxu0 0.0
    %291 = vmatpush1.msra.mxu0 %v56
    %292 = vmatprep.subr.mxu0 0.0
    %293 = vmatpush1.msra.mxu0 %v57
    %294 = vmatprep.subr.mxu0 0.0
    %295 = vmatpush1.msra.mxu0 0.0
    %296 = vmatprep.subr.mxu0 0.0
    %297 = vmatpush1.msra.mxu0 0.0
    %298 = vmatprep.subr.mxu0 0.0
    %299 = vmatpush1.msra.mxu0 0.0
    %300 = vmatprep.subr.mxu0 0.0
    %301 = vmatpush1.msra.mxu0 0.0
    %302 = vmatprep.subr.mxu0 0.0
    %303 = vmatpush1.msra.mxu0 0.0
    %304 = vmatprep.subr.mxu0 0.0
    %305 = vmatpush1.msra.mxu0 0.0
    %306 = vmatprep.subr.mxu0 0.0
    %307 = vmatpush1.msra.mxu0 0.0
    %308 = vmatprep.subr.mxu0 0.0
    %309 = vmatpush1.msra.mxu0 0.0
    %310 = vmatprep.subr.mxu0 0.0
    %311 = vmatpush1.msra.mxu0 0.0
    %312 = vmatprep.subr.mxu0 0.0
    %313 = vmatpush1.msra.mxu0 0.0
    %314 = vmatprep.subr.mxu0 0.0
    %315 = vmatpush1.msra.mxu0 0.0
    %316 = vmatprep.subr.mxu0 0.0
    %317 = vmatpush1.msra.mxu0 0.0
    %318 = vmatprep.subr.mxu0 0.0
    %319 = vmatpush1.msra.mxu0 0.0
    %320 = vmatprep.subr.mxu0 0.0
    %321 = vmatpush1.msra.mxu0 0.0
    %322 = vmatprep.subr.mxu0 0.0
    %323 = vmatpush1.msra.mxu0 0.0
    %324 = vmatprep.subr.mxu0 0.0
    %325 = vmatpush1.msra.mxu0 0.0
    %326 = vmatprep.subr.mxu0 0.0
    %327 = vmatpush1.msra.mxu0 0.0
    %328 = vmatprep.subr.mxu0 0.0
    %329 = vmatpush1.msra.mxu0 0.0
    %330 = vmatprep.subr.mxu0 0.0
    %331 = vmatpush1.msra.mxu0 0.0
    %332 = vmatprep.subr.mxu0 0.0
    %333 = vmatpush1.msra.mxu0 0.0
    %334 = vmatprep.subr.mxu0 0.0
    %335 = vmatpush1.msra.mxu0 0.0
    %336 = vmatprep.subr.mxu0 0.0
    %337 = vmatpush1.msra.mxu0 0.0
    %338 = vmatprep.subr.mxu0 0.0
    %339 = vmatpush1.msra.mxu0 0.0
    %340 = vmatprep.subr.mxu0 0.0
    %341 = vmatpush1.msra.mxu0 0.0
    %342 = vmatprep.subr.mxu0 0.0
    %343 = vmatpush1.msra.mxu0 0.0
    %344 = vmatprep.subr.mxu0 0.0
    %345 = vmatpush1.msra.mxu0 0.0
    %346 = vmatprep.subr.mxu0 0.0
    %347 = vmatpush1.msra.mxu0 0.0
    %348 = vmatprep.subr.mxu0 0.0
    %349 = vmatpush1.msra.mxu0 0.0
    %350 = vmatprep.mubr.f32.mxu0 0.0
    %351 = vmatmul.mubr.f32.gmra.mrb[0].mxu0 %v284
    %v352 = vpop.f32.mrb[0].mxu0
    %v353 = vadd.f32 %v175, %v352
    %v354 = vpop.f32.mrb[0].mxu0
    %355 = vdwg.mxu0
    %v356 = vtanh.pop %v353
    %v358 = vsel %vm208, %v356, 0
    %360 = vmatprep.subr.mxu0 0.0
    %361 = vmatpush1.msra.mxu0 %v54
    %362 = vmatprep.subr.mxu0 0.0
    %363 = vmatpush1.msra.mxu0 %v55
    %364 = vmatprep.subr.mxu0 0.0
    %365 = vmatpush1.msra.mxu0 %v56
    %366 = vmatprep.subr.mxu0 0.0
    %367 = vmatpush1.msra.mxu0 %v57
    %368 = vmatprep.subr.mxu0 0.0
    %369 = vmatpush1.msra.mxu0 0.0
    %370 = vmatprep.subr.mxu0 0.0
    %371 = vmatpush1.msra.mxu0 0.0
    %372 = vmatprep.subr.mxu0 0.0
    %373 = vmatpush1.msra.mxu0 0.0
    %374 = vmatprep.subr.mxu0 0.0
    %375 = vmatpush1.msra.mxu0 0.0
    %376 = vmatprep.subr.mxu0 0.0
    %377 = vmatpush1.msra.mxu0 0.0
    %378 = vmatprep.subr.mxu0 0.0
    %379 = vmatpush1.msra.mxu0 0.0
    %380 = vmatprep.subr.mxu0 0.0
    %381 = vmatpush1.msra.mxu0 0.0
    %382 = vmatprep.subr.mxu0 0.0
    %383 = vmatpush1.msra.mxu0 0.0
    %384 = vmatprep.subr.mxu0 0.0
    %385 = vmatpush1.msra.mxu0 0.0
    %386 = vmatprep.subr.mxu0 0.0
    %387 = vmatpush1.msra.mxu0 0.0
    %388 = vmatprep.subr.mxu0 0.0
    %389 = vmatpush1.msra.mxu0 0.0
    %390 = vmatprep.subr.mxu0 0.0
    %391 = vmatpush1.msra.mxu0 0.0
    %392 = vmatprep.subr.mxu0 0.0
    %393 = vmatpush1.msra.mxu0 0.0
    %394 = vmatprep.subr.mxu0 0.0
    %395 = vmatpush1.msra.mxu0 0.0
    %396 = vmatprep.subr.mxu0 0.0
    %397 = vmatpush1.msra.mxu0 0.0
    %398 = vmatprep.subr.mxu0 0.0
    %399 = vmatpush1.msra.mxu0 0.0
    %400 = vmatprep.subr.mxu0 0.0
    %401 = vmatpush1.msra.mxu0 0.0
    %402 = vmatprep.subr.mxu0 0.0
    %403 = vmatpush1.msra.mxu0 0.0
    %404 = vmatprep.subr.mxu0 0.0
    %405 = vmatpush1.msra.mxu0 0.0
    %406 = vmatprep.subr.mxu0 0.0
    %407 = vmatpush1.msra.mxu0 0.0
    %408 = vmatprep.subr.mxu0 0.0
    %409 = vmatpush1.msra.mxu0 0.0
    %410 = vmatprep.subr.mxu0 0.0
    %411 = vmatpush1.msra.mxu0 0.0
    %412 = vmatprep.subr.mxu0 0.0
    %413 = vmatpush1.msra.mxu0 0.0
    %414 = vmatprep.subr.mxu0 0.0
    %415 = vmatpush1.msra.mxu0 0.0
    %416 = vmatprep.subr.mxu0 0.0
    %417 = vmatpush1.msra.mxu0 0.0
    %418 = vmatprep.subr.mxu0 0.0
    %419 = vmatpush1.msra.mxu0 0.0
    %420 = vmatprep.subr.mxu0 0.0
    %421 = vmatpush1.msra.mxu0 0.0
    %422 = vmatprep.subr.mxu0 0.0
    %423 = vmatpush1.msra.mxu0 0.0
    %424 = vmatprep.mubr.f32.mxu0 0.0
    %425 = vmatmul.mubr.f32.gmra.mrb[0].mxu0 %v358
    %v426 = vpop.f32.mrb[0].mxu0
    %v427 = vadd.f32 %v180, %v426
    %v428 = vpop.f32.mrb[0].mxu0
    %429 = vdwg.mxu0
    %v430 = vtanh.pop %v427
    %v432 = vsel %vm208, %v430, 0
    %434 = vmatprep.subr.mxu0 0.0
    %435 = vmatpush1.msra.mxu0 %v54
    %436 = vmatprep.subr.mxu0 0.0
    %437 = vmatpush1.msra.mxu0 %v55
    %438 = vmatprep.subr.mxu0 0.0
    %439 = vmatpush1.msra.mxu0 %v56
    %440 = vmatprep.subr.mxu0 0.0
    %441 = vmatpush1.msra.mxu0 %v57
    %442 = vmatprep.subr.mxu0 0.0
    %443 = vmatpush1.msra.mxu0 0.0
    %444 = vmatprep.subr.mxu0 0.0
    %445 = vmatpush1.msra.mxu0 0.0
    %446 = vmatprep.subr.mxu0 0.0
    %447 = vmatpush1.msra.mxu0 0.0
    %448 = vmatprep.subr.mxu0 0.0
    %449 = vmatpush1.msra.mxu0 0.0
    %450 = vmatprep.subr.mxu0 0.0
    %451 = vmatpush1.msra.mxu0 0.0
    %452 = vmatprep.subr.mxu0 0.0
    %453 = vmatpush1.msra.mxu0 0.0
    %454 = vmatprep.subr.mxu0 0.0
    %455 = vmatpush1.msra.mxu0 0.0
    %456 = vmatprep.subr.mxu0 0.0
    %457 = vmatpush1.msra.mxu0 0.0
    %458 = vmatprep.subr.mxu0 0.0
    %459 = vmatpush1.msra.mxu0 0.0
    %460 = vmatprep.subr.mxu0 0.0
    %461 = vmatpush1.msra.mxu0 0.0
    %462 = vmatprep.subr.mxu0 0.0
    %463 = vmatpush1.msra.mxu0 0.0
    %464 = vmatprep.subr.mxu0 0.0
    %465 = vmatpush1.msra.mxu0 0.0
    %466 = vmatprep.subr.mxu0 0.0
    %467 = vmatpush1.msra.mxu0 0.0
    %468 = vmatprep.subr.mxu0 0.0
    %469 = vmatpush1.msra.mxu0 0.0
    %470 = vmatprep.subr.mxu0 0.0
    %471 = vmatpush1.msra.mxu0 0.0
    %472 = vmatprep.subr.mxu0 0.0
    %473 = vmatpush1.msra.mxu0 0.0
    %474 = vmatprep.subr.mxu0 0.0
    %475 = vmatpush1.msra.mxu0 0.0
    %476 = vmatprep.subr.mxu0 0.0
    %477 = vmatpush1.msra.mxu0 0.0
    %478 = vmatprep.subr.mxu0 0.0
    %479 = vmatpush1.msra.mxu0 0.0
    %480 = vmatprep.subr.mxu0 0.0
    %481 = vmatpush1.msra.mxu0 0.0
    %482 = vmatprep.subr.mxu0 0.0
    %483 = vmatpush1.msra.mxu0 0.0
    %484 = vmatprep.subr.mxu0 0.0
    %485 = vmatpush1.msra.mxu0 0.0
    %486 = vmatprep.subr.mxu0 0.0
    %487 = vmatpush1.msra.mxu0 0.0
    %488 = vmatprep.subr.mxu0 0.0
    %489 = vmatpush1.msra.mxu0 0.0
    %490 = vmatprep.subr.mxu0 0.0
    %491 = vmatpush1.msra.mxu0 0.0
    %492 = vmatprep.subr.mxu0 0.0
    %493 = vmatpush1.msra.mxu0 0.0
    %494 = vmatprep.subr.mxu0 0.0
    %495 = vmatpush1.msra.mxu0 0.0
    %496 = vmatprep.subr.mxu0 0.0
    %497 = vmatpush1.msra.mxu0 0.0
    %498 = vmatprep.mubr.f32.mxu0 0.0
    %499 = vmatmul.mubr.f32.gmra.mrb[0].mxu0 %v432
    %v500 = vpop.f32.mrb[0].mxu0
    %v501 = vadd.f32 %v185, %v500
    %v502 = vpop.f32.mrb[0].mxu0
    %503 = vdwg.mxu0
    %v504 = vtanh.pop %v501
    %v506 = vsel %vm208, %v504, 0
    %508 = vmatprep.subr.mxu0 0.0
    %509 = vmatpush1.msra.mxu0 %v54
    %510 = vmatprep.subr.mxu0 0.0
    %511 = vmatpush1.msra.mxu0 %v55
    %512 = vmatprep.subr.mxu0 0.0
    %513 = vmatpush1.msra.mxu0 %v56
    %514 = vmatprep.subr.mxu0 0.0
    %515 = vmatpush1.msra.mxu0 %v57
    %516 = vmatprep.subr.mxu0 0.0
    %517 = vmatpush1.msra.mxu0 0.0
    %518 = vmatprep.subr.mxu0 0.0
    %519 = vmatpush1.msra.mxu0 0.0
    %520 = vmatprep.subr.mxu0 0.0
    %521 = vmatpush1.msra.mxu0 0.0
    %522 = vmatprep.subr.mxu0 0.0
    %523 = vmatpush1.msra.mxu0 0.0
    %524 = vmatprep.subr.mxu0 0.0
    %525 = vmatpush1.msra.mxu0 0.0
    %526 = vmatprep.subr.mxu0 0.0
    %527 = vmatpush1.msra.mxu0 0.0
    %528 = vmatprep.subr.mxu0 0.0
    %529 = vmatpush1.msra.mxu0 0.0
    %530 = vmatprep.subr.mxu0 0.0
    %531 = vmatpush1.msra.mxu0 0.0
    %532 = vmatprep.subr.mxu0 0.0
    %533 = vmatpush1.msra.mxu0 0.0
    %534 = vmatprep.subr.mxu0 0.0
    %535 = vmatpush1.msra.mxu0 0.0
    %536 = vmatprep.subr.mxu0 0.0
    %537 = vmatpush1.msra.mxu0 0.0
    %538 = vmatprep.subr.mxu0 0.0
    %539 = vmatpush1.msra.mxu0 0.0
    %540 = vmatprep.subr.mxu0 0.0
    %541 = vmatpush1.msra.mxu0 0.0
    %542 = vmatprep.subr.mxu0 0.0
    %543 = vmatpush1.msra.mxu0 0.0
    %544 = vmatprep.subr.mxu0 0.0
    %545 = vmatpush1.msra.mxu0 0.0
    %546 = vmatprep.subr.mxu0 0.0
    %547 = vmatpush1.msra.mxu0 0.0
    %548 = vmatprep.subr.mxu0 0.0
    %549 = vmatpush1.msra.mxu0 0.0
    %550 = vmatprep.subr.mxu0 0.0
    %551 = vmatpush1.msra.mxu0 0.0
    %552 = vmatprep.subr.mxu0 0.0
    %553 = vmatpush1.msra.mxu0 0.0
    %554 = vmatprep.subr.mxu0 0.0
    %555 = vmatpush1.msra.mxu0 0.0
    %556 = vmatprep.subr.mxu0 0.0
    %557 = vmatpush1.msra.mxu0 0.0
    %558 = vmatprep.subr.mxu0 0.0
    %559 = vmatpush1.msra.mxu0 0.0
    %560 = vmatprep.subr.mxu0 0.0
    %561 = vmatpush1.msra.mxu0 0.0
    %562 = vmatprep.subr.mxu0 0.0
    %563 = vmatpush1.msra.mxu0 0.0
    %564 = vmatprep.subr.mxu0 0.0
    %565 = vmatpush1.msra.mxu0 0.0
    %566 = vmatprep.subr.mxu0 0.0
    %567 = vmatpush1.msra.mxu0 0.0
    %568 = vmatprep.subr.mxu0 0.0
    %569 = vmatpush1.msra.mxu0 0.0
    %570 = vmatprep.subr.mxu0 0.0
    %571 = vmatpush1.msra.mxu0 0.0
    %572 = vmatprep.mubr.f32.mxu0 0.0
    %573 = vmatmul.mubr.f32.gmra.mrb[0].mxu0 %v506
    %v574 = vpop.f32.mrb[0].mxu0
    %v575 = vadd.f32 %v190, %v574
    %v576 = vpop.f32.mrb[0].mxu0
    %577 = vdwg.mxu0
    %v578 = vtanh.pop %v575
    %v580 = vsel %vm208, %v578, 0
    %582 = vmatprep.subr.mxu0 0.0
    %583 = vmatpush1.msra.mxu0 %v54
    %584 = vmatprep.subr.mxu0 0.0
    %585 = vmatpush1.msra.mxu0 %v55
    %586 = vmatprep.subr.mxu0 0.0
    %587 = vmatpush1.msra.mxu0 %v56
    %588 = vmatprep.subr.mxu0 0.0
    %589 = vmatpush1.msra.mxu0 %v57
    %590 = vmatprep.subr.mxu0 0.0
    %591 = vmatpush1.msra.mxu0 0.0
    %592 = vmatprep.subr.mxu0 0.0
    %593 = vmatpush1.msra.mxu0 0.0
    %594 = vmatprep.subr.mxu0 0.0
    %595 = vmatpush1.msra.mxu0 0.0
    %596 = vmatprep.subr.mxu0 0.0
    %597 = vmatpush1.msra.mxu0 0.0
    %598 = vmatprep.subr.mxu0 0.0
    %599 = vmatpush1.msra.mxu0 0.0
    %600 = vmatprep.subr.mxu0 0.0
    %601 = vmatpush1.msra.mxu0 0.0
    %602 = vmatprep.subr.mxu0 0.0
    %603 = vmatpush1.msra.mxu0 0.0
    %604 = vmatprep.subr.mxu0 0.0
    %605 = vmatpush1.msra.mxu0 0.0
    %606 = vmatprep.subr.mxu0 0.0
    %607 = vmatpush1.msra.mxu0 0.0
    %608 = vmatprep.subr.mxu0 0.0
    %609 = vmatpush1.msra.mxu0 0.0
    %610 = vmatprep.subr.mxu0 0.0
    %611 = vmatpush1.msra.mxu0 0.0
    %612 = vmatprep.subr.mxu0 0.0
    %613 = vmatpush1.msra.mxu0 0.0
    %614 = vmatprep.subr.mxu0 0.0
    %615 = vmatpush1.msra.mxu0 0.0
    %616 = vmatprep.subr.mxu0 0.0
    %617 = vmatpush1.msra.mxu0 0.0
    %618 = vmatprep.subr.mxu0 0.0
    %619 = vmatpush1.msra.mxu0 0.0
    %620 = vmatprep.subr.mxu0 0.0
    %621 = vmatpush1.msra.mxu0 0.0
    %622 = vmatprep.subr.mxu0 0.0
    %623 = vmatpush1.msra.mxu0 0.0
    %624 = vmatprep.subr.mxu0 0.0
    %625 = vmatpush1.msra.mxu0 0.0
    %626 = vmatprep.subr.mxu0 0.0
    %627 = vmatpush1.msra.mxu0 0.0
    %628 = vmatprep.subr.mxu0 0.0
    %629 = vmatpush1.msra.mxu0 0.0
    %630 = vmatprep.subr.mxu0 0.0
    %631 = vmatpush1.msra.mxu0 0.0
    %632 = vmatprep.subr.mxu0 0.0
    %633 = vmatpush1.msra.mxu0 0.0
    %634 = vmatprep.subr.mxu0 0.0
    %635 = vmatpush1.msra.mxu0 0.0
    %636 = vmatprep.subr.mxu0 0.0
    %637 = vmatpush1.msra.mxu0 0.0
    %638 = vmatprep.subr.mxu0 0.0
    %639 = vmatpush1.msra.mxu0 0.0
    %640 = vmatprep.subr.mxu0 0.0
    %641 = vmatpush1.msra.mxu0 0.0
    %642 = vmatprep.subr.mxu0 0.0
    %643 = vmatpush1.msra.mxu0 0.0
    %644 = vmatprep.subr.mxu0 0.0
    %645 = vmatpush1.msra.mxu0 0.0
    %646 = vmatprep.mubr.f32.mxu0 0.0
    %647 = vmatmul.mubr.f32.gmra.mrb[0].mxu0 %v580
    %v648 = vpop.f32.mrb[0].mxu0
    %v649 = vadd.f32 %v195, %v648
    %v650 = vpop.f32.mrb[0].mxu0
    %651 = vdwg.mxu0
    %v652 = vtanh.pop %v649
    %v654 = vsel %vm208, %v652, 0
    %656 = vmatprep.subr.mxu0 0.0
    %657 = vmatpush1.msra.mxu0 %v54
    %658 = vmatprep.subr.mxu0 0.0
    %659 = vmatpush1.msra.mxu0 %v55
    %660 = vmatprep.subr.mxu0 0.0
    %661 = vmatpush1.msra.mxu0 %v56
    %662 = vmatprep.subr.mxu0 0.0
    %663 = vmatpush1.msra.mxu0 %v57
    %664 = vmatprep.subr.mxu0 0.0
    %665 = vmatpush1.msra.mxu0 0.0
    %666 = vmatprep.subr.mxu0 0.0
    %667 = vmatpush1.msra.mxu0 0.0
    %668 = vmatprep.subr.mxu0 0.0
    %669 = vmatpush1.msra.mxu0 0.0
    %670 = vmatprep.subr.mxu0 0.0
    %671 = vmatpush1.msra.mxu0 0.0
    %672 = vmatprep.subr.mxu0 0.0
    %673 = vmatpush1.msra.mxu0 0.0
    %674 = vmatprep.subr.mxu0 0.0
    %675 = vmatpush1.msra.mxu0 0.0
    %676 = vmatprep.subr.mxu0 0.0
    %677 = vmatpush1.msra.mxu0 0.0
    %678 = vmatprep.subr.mxu0 0.0
    %679 = vmatpush1.msra.mxu0 0.0
    %680 = vmatprep.subr.mxu0 0.0
    %681 = vmatpush1.msra.mxu0 0.0
    %682 = vmatprep.subr.mxu0 0.0
    %683 = vmatpush1.msra.mxu0 0.0
    %684 = vmatprep.subr.mxu0 0.0
    %685 = vmatpush1.msra.mxu0 0.0
    %686 = vmatprep.subr.mxu0 0.0
    %687 = vmatpush1.msra.mxu0 0.0
    %688 = vmatprep.subr.mxu0 0.0
    %689 = vmatpush1.msra.mxu0 0.0
    %690 = vmatprep.subr.mxu0 0.0
    %691 = vmatpush1.msra.mxu0 0.0
    %692 = vmatprep.subr.mxu0 0.0
    %693 = vmatpush1.msra.mxu0 0.0
    %694 = vmatprep.subr.mxu0 0.0
    %695 = vmatpush1.msra.mxu0 0.0
    %696 = vmatprep.subr.mxu0 0.0
    %697 = vmatpush1.msra.mxu0 0.0
    %698 = vmatprep.subr.mxu0 0.0
    %699 = vmatpush1.msra.mxu0 0.0
    %700 = vmatprep.subr.mxu0 0.0
    %701 = vmatpush1.msra.mxu0 0.0
    %702 = vmatprep.subr.mxu0 0.0
    %703 = vmatpush1.msra.mxu0 0.0
    %704 = vmatprep.subr.mxu0 0.0
    %705 = vmatpush1.msra.mxu0 0.0
    %706 = vmatprep.subr.mxu0 0.0
    %707 = vmatpush1.msra.mxu0 0.0
    %708 = vmatprep.subr.mxu0 0.0
    %709 = vmatpush1.msra.mxu0 0.0
    %710 = vmatprep.subr.mxu0 0.0
    %711 = vmatpush1.msra.mxu0 0.0
    %712 = vmatprep.subr.mxu0 0.0
    %713 = vmatpush1.msra.mxu0 0.0
    %714 = vmatprep.subr.mxu0 0.0
    %715 = vmatpush1.msra.mxu0 0.0
    %716 = vmatprep.subr.mxu0 0.0
    %717 = vmatpush1.msra.mxu0 0.0
    %718 = vmatprep.subr.mxu0 0.0
    %719 = vmatpush1.msra.mxu0 0.0
    %720 = vmatprep.mubr.f32.mxu0 0.0
    %721 = vmatmul.mubr.f32.gmra.mrb[0].mxu0 %v654
    %v722 = vpop.f32.mrb[0].mxu0
    %v723 = vadd.f32 %v200, %v722
    %v724 = vpop.f32.mrb[0].mxu0
    %725 = vdwg.mxu0
    %v726 = vtanh.pop %v723
    %v728 = vsel %vm208, %v726, 0
    %730 = vmatprep.subr.mxu0 0.0
    %731 = vmatpush1.msra.mxu0 %v54
    %732 = vmatprep.subr.mxu0 0.0
    %733 = vmatpush1.msra.mxu0 %v55
    %734 = vmatprep.subr.mxu0 0.0
    %735 = vmatpush1.msra.mxu0 %v56
    %736 = vmatprep.subr.mxu0 0.0
    %737 = vmatpush1.msra.mxu0 %v57
    %738 = vmatprep.subr.mxu0 0.0
    %739 = vmatpush1.msra.mxu0 0.0
    %740 = vmatprep.subr.mxu0 0.0
    %741 = vmatpush1.msra.mxu0 0.0
    %742 = vmatprep.subr.mxu0 0.0
    %743 = vmatpush1.msra.mxu0 0.0
    %744 = vmatprep.subr.mxu0 0.0
    %745 = vmatpush1.msra.mxu0 0.0
    %746 = vmatprep.subr.mxu0 0.0
    %747 = vmatpush1.msra.mxu0 0.0
    %748 = vmatprep.subr.mxu0 0.0
    %749 = vmatpush1.msra.mxu0 0.0
    %750 = vmatprep.subr.mxu0 0.0
    %751 = vmatpush1.msra.mxu0 0.0
    %752 = vmatprep.subr.mxu0 0.0
    %753 = vmatpush1.msra.mxu0 0.0
    %754 = vmatprep.subr.mxu0 0.0
    %755 = vmatpush1.msra.mxu0 0.0
    %756 = vmatprep.subr.mxu0 0.0
    %757 = vmatpush1.msra.mxu0 0.0
    %758 = vmatprep.subr.mxu0 0.0
    %759 = vmatpush1.msra.mxu0 0.0
    %760 = vmatprep.subr.mxu0 0.0
    %761 = vmatpush1.msra.mxu0 0.0
    %762 = vmatprep.subr.mxu0 0.0
    %763 = vmatpush1.msra.mxu0 0.0
    %764 = vmatprep.subr.mxu0 0.0
    %765 = vmatpush1.msra.mxu0 0.0
    %766 = vmatprep.subr.mxu0 0.0
    %767 = vmatpush1.msra.mxu0 0.0
    %768 = vmatprep.subr.mxu0 0.0
    %769 = vmatpush1.msra.mxu0 0.0
    %770 = vmatprep.subr.mxu0 0.0
    %771 = vmatpush1.msra.mxu0 0.0
    %772 = vmatprep.subr.mxu0 0.0
    %773 = vmatpush1.msra.mxu0 0.0
    %774 = vmatprep.subr.mxu0 0.0
    %775 = vmatpush1.msra.mxu0 0.0
    %776 = vmatprep.subr.mxu0 0.0
    %777 = vmatpush1.msra.mxu0 0.0
    %778 = vmatprep.subr.mxu0 0.0
    %779 = vmatpush1.msra.mxu0 0.0
    %780 = vmatprep.subr.mxu0 0.0
    %781 = vmatpush1.msra.mxu0 0.0
    %782 = vmatprep.subr.mxu0 0.0
    %783 = vmatpush1.msra.mxu0 0.0
    %784 = vmatprep.subr.mxu0 0.0
    %785 = vmatpush1.msra.mxu0 0.0
    %786 = vmatprep.subr.mxu0 0.0
    %787 = vmatpush1.msra.mxu0 0.0
    %788 = vmatprep.subr.mxu0 0.0
    %789 = vmatpush1.msra.mxu0 0.0
    %790 = vmatprep.subr.mxu0 0.0
    %791 = vmatpush1.msra.mxu0 0.0
    %792 = vmatprep.subr.mxu0 0.0
    %793 = vmatpush1.msra.mxu0 0.0
    %794 = vmatprep.mubr.f32.mxu0 0.0
    %795 = vmatmul.mubr.f32.gmra.mrb[0].mxu0 %v728
    %v796 = vpop.f32.mrb[0].mxu0
    %v797 = vadd.f32 %v205, %v796
    %v798 = vpop.f32.mrb[0].mxu0
    %799 = vdwg.mxu0
    %v800 = vtanh.pop %v797
    %v802 = vlaneseq
    %v803 = vshrl.u32 %v802, 7
    %v804 = vsub.s32 0, %v803
    %v805 = vrot.slane %v63, %v804
    %v808 = vsel %vm208, %v800, 0
    %810 = vmatprep.subr.mxu0 0.0
    %811 = vmatpush1.msra.mxu0 %v58
    %812 = vmatprep.subr.mxu0 0.0
    %813 = vmatpush1.msra.mxu0 %v59
    %814 = vmatprep.subr.mxu0 0.0
    %815 = vmatpush1.msra.mxu0 %v60
    %816 = vmatprep.subr.mxu0 0.0
    %817 = vmatpush1.msra.mxu0 %v61
    %818 = vmatprep.subr.mxu0 0.0
    %819 = vmatpush1.msra.mxu0 0.0
    %820 = vmatprep.subr.mxu0 0.0
    %821 = vmatpush1.msra.mxu0 0.0
    %822 = vmatprep.subr.mxu0 0.0
    %823 = vmatpush1.msra.mxu0 0.0
    %824 = vmatprep.subr.mxu0 0.0
    %825 = vmatpush1.msra.mxu0 0.0
    %826 = vmatprep.subr.mxu0 0.0
    %827 = vmatpush1.msra.mxu0 0.0
    %828 = vmatprep.subr.mxu0 0.0
    %829 = vmatpush1.msra.mxu0 0.0
    %830 = vmatprep.subr.mxu0 0.0
    %831 = vmatpush1.msra.mxu0 0.0
    %832 = vmatprep.subr.mxu0 0.0
    %833 = vmatpush1.msra.mxu0 0.0
    %834 = vmatprep.subr.mxu0 0.0
    %835 = vmatpush1.msra.mxu0 0.0
    %836 = vmatprep.subr.mxu0 0.0
    %837 = vmatpush1.msra.mxu0 0.0
    %838 = vmatprep.subr.mxu0 0.0
    %839 = vmatpush1.msra.mxu0 0.0
    %840 = vmatprep.subr.mxu0 0.0
    %841 = vmatpush1.msra.mxu0 0.0
    %842 = vmatprep.subr.mxu0 0.0
    %843 = vmatpush1.msra.mxu0 0.0
    %844 = vmatprep.subr.mxu0 0.0
    %845 = vmatpush1.msra.mxu0 0.0
    %846 = vmatprep.subr.mxu0 0.0
    %847 = vmatpush1.msra.mxu0 0.0
    %848 = vmatprep.subr.mxu0 0.0
    %849 = vmatpush1.msra.mxu0 0.0
    %850 = vmatprep.subr.mxu0 0.0
    %851 = vmatpush1.msra.mxu0 0.0
    %852 = vmatprep.subr.mxu0 0.0
    %853 = vmatpush1.msra.mxu0 0.0
    %854 = vmatprep.subr.mxu0 0.0
    %855 = vmatpush1.msra.mxu0 0.0
    %856 = vmatprep.subr.mxu0 0.0
    %857 = vmatpush1.msra.mxu0 0.0
    %858 = vmatprep.subr.mxu0 0.0
    %859 = vmatpush1.msra.mxu0 0.0
    %860 = vmatprep.subr.mxu0 0.0
    %861 = vmatpush1.msra.mxu0 0.0
    %862 = vmatprep.subr.mxu0 0.0
    %863 = vmatpush1.msra.mxu0 0.0
    %864 = vmatprep.subr.mxu0 0.0
    %865 = vmatpush1.msra.mxu0 0.0
    %866 = vmatprep.subr.mxu0 0.0
    %867 = vmatpush1.msra.mxu0 0.0
    %868 = vmatprep.subr.mxu0 0.0
    %869 = vmatpush1.msra.mxu0 0.0
    %870 = vmatprep.subr.mxu0 0.0
    %871 = vmatpush1.msra.mxu0 0.0
    %872 = vmatprep.subr.mxu0 0.0
    %873 = vmatpush1.msra.mxu0 0.0
    %874 = vmatprep.mubr.f32.mxu0 0.0
    %875 = vmatmul.mubr.f32.gmra.mrb[0].mxu0 %v808
    %v876 = vpop.f32.mrb[0].mxu0
    %v877 = vadd.f32 %v805, %v876
    %v878 = vpop.f32.mrb[0].mxu0
    %879 = vdwg.mxu0
    %vm880 = vcmask 64512
    %881 = vst.msk [vmem:[#allocation7] sm:$0xff] %vm880, %v877
    // Predicated region
    $region34: #{tpu_custom_call.1} parent=1 // pred_check
      _
    $region35: #{tpu_custom_call.1} parent=1 // pred_check_branch
      %883 = sbr.rel (0) target = $region37
    $region36: #{tpu_custom_call.1} parent=1 // pred_region
      %s885 = ssub.s32 128, 128
      %886 = vsyncadd [#allocation4], %s885
      %s888 = sshll.u32 [#allocation7], 4
      %s889 = int_to_ptr.vmem [resolvable:$true] %s888
      %891 = dma.vmem_to_hbm [thread:$0]  %s889, 128, %s6, [#allocation4]
    $region37: #{tpu_custom_call.1} parent=1 // pred_fallthru
      _
    // Predicated region
    $region38: #{tpu_custom_call.1} parent=1 // pred_check
      _
    $region39: #{tpu_custom_call.1} parent=1 // pred_check_branch
      %893 = sbr.rel (0) target = $region41
    $region40: #{tpu_custom_call.1} parent=1 // pred_region
      %894 = dma.done [#allocation4], 128
    $region41: #{tpu_custom_call.1} parent=1 // pred_fallthru
      _
    %895 = vsyncpa [#allocation3], 1
    %896 = vsyncpa [#allocation6], 1
    %897 = vsyncpa [#allocation4], 1

</llo_original>
